<compile_context>
chip_gen: v5e
topology: v5e:2x2
jax: 0.10.0
libtpu: 0.0.40
codegen_flags: <defaults>
</compile_context>

<pallas_src>
import math

import jax
import jax.numpy as jnp
from jax import lax
from jax.experimental import pallas as pl
from jax.experimental.pallas import tpu as pltpu


def _round_up(x, m):
    return ((x + m - 1) // m) * m


def _divisors(n):
    ds = set()
    i = 1
    while i * i <= n:
        if n % i == 0:
            ds.add(i)
            ds.add(n // i)
        i += 1
    return sorted(ds)


def _bconv_kernel(w_ref, b_ref, x_ref, o_ref):
    """One (group, lane-tile) step.

    w_ref : (C_out, K_pad)   im2col-ordered filters for this group
    b_ref : (C_out, 1)       bias (f32)
    x_ref : (K_pad, TL)      im2col patches, spatial positions on lanes
    o_ref : (C_out, TL)      output tile (lane-dense, no channel padding)
    """
    acc = jnp.dot(w_ref[...], x_ref[...], preferred_element_type=jnp.float32)
    acc = acc + b_ref[...].astype(jnp.float32)
    o_ref[...] = acc.astype(o_ref.dtype)


def batch_conv2d_5d(x, weight, bias, *, stride=1, padding=0, dilation=1,
                    compute_dtype=None):
    """x: (b_i, b_j, C_in, H, W); weight: (b_i*C_out, C_in, KH, KW); bias: (b_i*C_out,).

    Returns (b_i, b_j, C_out, H_out, W_out), matching BatchConv2D_5D.forward.
    """
    b_i, b_j, C_in, H, W = x.shape
    G, B = b_i, b_j
    KH, KW = weight.shape[-2], weight.shape[-1]
    assert weight.shape[0] % G == 0, (weight.shape, G)
    C_out = weight.shape[0] // G
    SH = SW = stride
    PH = PW = padding
    DH = DW = dilation
    H_out = (H + 2 * PH - DH * (KH - 1) - 1) // SH + 1
    W_out = (W + 2 * PW - DW * (KW - 1) - 1) // SW + 1
    HW = H_out * W_out
    HW_pad = _round_up(HW, 128)          # per-image lane padding (often no-op)
    K = KH * KW * C_in
    K_pad = _round_up(K, 8)              # sublane-tidy contraction dim
    N_total = B * HW_pad

    op_dtype = jnp.dtype(compute_dtype) if compute_dtype is not None else x.dtype

    # ---- wrapper-side im2col (plain JAX / XLA layout plumbing) --------------
    x_cl = jnp.transpose(x, (0, 1, 3, 4, 2)).astype(op_dtype)      # (G,B,H,W,Cin)
    x_p = jnp.pad(x_cl, ((0, 0), (0, 0), (PH, PH), (PW, PW), (0, 0)))
    taps = []
    for ki in range(KH):
        r0 = ki * DH
        r1 = r0 + SH * (H_out - 1) + 1
        for kj in range(KW):
            c0 = kj * DW
            c1 = c0 + SW * (W_out - 1) + 1
            taps.append(lax.slice(x_p, (0, 0, r0, c0, 0),
                                  (G, B, r1, c1, C_in),
                                  (1, 1, SH, SW, 1)))   # (G,B,H_out,W_out,Cin)
    pat = jnp.concatenate(taps, axis=-1) if len(taps) > 1 else taps[0]
    pat = pat.reshape(G, B, HW, K)
    pat = jnp.pad(pat, ((0, 0), (0, 0), (0, HW_pad - HW), (0, K_pad - K)))
    # (G, K_pad, B*HW_pad): contraction on sublanes, (image, spatial) on lanes
    pat = jnp.transpose(pat, (0, 3, 1, 2)).reshape(G, K_pad, N_total)

    # grouped Conv2d weight (G*C_out, Cin, KH, KW) -> (G, C_out, K_pad)
    w_g = weight.reshape(G, C_out, C_in, KH, KW)
    w_mat = jnp.transpose(w_g, (0, 1, 3, 4, 2)).reshape(G, C_out, K)
    w_mat = jnp.pad(w_mat, ((0, 0), (0, 0), (0, K_pad - K))).astype(op_dtype)
    b_mat = bias.reshape(G, C_out, 1).astype(jnp.float32)

    # ---- per-generation VMEM budget & lane-tile selection -------------------
    try:
        info = pltpu.get_tpu_info()
        vmem_phys = int(getattr(info, "vmem_capacity_bytes", 0)) or (64 << 20)
    except Exception:
        vmem_phys = 64 << 20                       # v7x-safe default
    vmem_limit = min(vmem_phys * 3 // 4, 112 << 20)

    in_b = jnp.dtype(op_dtype).itemsize
    out_b = jnp.dtype(x.dtype).itemsize
    c_out8 = _round_up(C_out, 8)

    def footprint(tl):
        return (2 * K_pad * tl * in_b              # double-buffered patch block
                + 2 * C_out * tl * out_b           # double-buffered output block
                + c_out8 * tl * 4                  # f32 accumulator
                + 2 * C_out * K_pad * in_b         # weights
                + 2 * C_out * 4)                   # bias

    budget = int(vmem_limit * 0.6)
    divs = _divisors(N_total // 128)
    TL = 128
    for d in divs:
        tl = d * 128
        if footprint(tl) <= budget:
            TL = tl
    # keep >= 2 grid steps when possible so both v7x TensorCores get work
    if G * (N_total // TL) < 2:
        smaller = [d * 128 for d in divs if d * 128 < TL]
        if smaller:
            TL = smaller[-1]
    n_tiles = N_total // TL

    flops = 2 * G * B * HW * K * C_out
    bytes_accessed = int(pat.size * pat.dtype.itemsize
                         + w_mat.size * w_mat.dtype.itemsize
                         + b_mat.size * b_mat.dtype.itemsize
                         + G * C_out * N_total * out_b)
    cost = pl.CostEstimate(flops=flops, transcendentals=0,
                           bytes_accessed=bytes_accessed)

    out_flat = pl.pallas_call(
        _bconv_kernel,
        out_shape=jax.ShapeDtypeStruct((G, C_out, N_total), x.dtype),
        grid=(G, n_tiles),
        in_specs=[
            pl.BlockSpec((None, C_out, K_pad), lambda g, t: (g, 0, 0)),
            pl.BlockSpec((None, C_out, 1), lambda g, t: (g, 0, 0)),
            pl.BlockSpec((None, K_pad, TL), lambda g, t: (g, 0, t)),
        ],
        out_specs=pl.BlockSpec((None, C_out, TL), lambda g, t: (g, 0, t)),
        compiler_params=pltpu.CompilerParams(
            dimension_semantics=("parallel", "parallel"),
            vmem_limit_bytes=int(vmem_limit)),
        cost_estimate=cost,
    )(w_mat, b_mat, pat)

    # strip per-image lane padding and restore PyTorch layout
    out = out_flat.reshape(G, C_out, B, HW_pad)[..., :HW]
    out = out.reshape(G, C_out, B, H_out, W_out)
    return jnp.transpose(out, (0, 2, 1, 3, 4))     # (b_i, b_j, C_out, H_out, W_out)


def reference(x, weight, bias, stride, padding, dilation):
    """Pure-JAX mirror of the PyTorch forward (grouped conv via lax)."""
    b_i, b_j, C_in, H, W = x.shape
    G = b_i
    C_out = weight.shape[0] // G
    xin = jnp.transpose(x, (1, 0, 2, 3, 4)).reshape(b_j, G * C_in, H, W)
    out = lax.conv_general_dilated(
        xin, weight,
        window_strides=(stride, stride),
        padding=((padding, padding), (padding, padding)),
        rhs_dilation=(dilation, dilation),
        dimension_numbers=('NCHW', 'OIHW', 'NCHW'),
        feature_group_count=G)
    out = out + bias[None, :, None, None]
    Ho, Wo = out.shape[-2], out.shape[-1]
    out = out.reshape(b_j, G, C_out, Ho, Wo)
    return jnp.transpose(out, (1, 0, 2, 3, 4))


if __name__ == "__main__":
    key = jax.random.PRNGKey(0)
    # b_i = number of parallel groups (== conv groups), b_j = per-group batch
    b_i, b_j = 2, 3
    C_in, C_out = 4, 5
    H = W = 16
    KH = KW = 3
    stride, padding, dilation = 1, 1, 1

    k1, k2, k3 = jax.random.split(key, 3)
    x = jax.random.normal(k1, (b_i, b_j, C_in, H, W), dtype=jnp.float32)

    # Deterministic Conv2d-style init (uniform in +/- 1/sqrt(fan_in)).
    fan_in = C_in * KH * KW
    bound = 1.0 / math.sqrt(fan_in)
    weight = jax.random.uniform(k2, (C_out * b_i, C_in, KH, KW), jnp.float32,
                                minval=-bound, maxval=bound)
    bias = jax.random.uniform(k3, (C_out * b_i,), jnp.float32,
                              minval=-bound, maxval=bound)

    out = batch_conv2d_5d(x, weight, bias, stride=stride, padding=padding,
                          dilation=dilation)
    out = jax.block_until_ready(out)

    ref = reference(x, weight, bias, stride, padding, dilation)
    assert out.shape == ref.shape, (out.shape, ref.shape)
    if not jnp.allclose(out, ref, atol=1e-4, rtol=1e-4):
        raise AssertionError("Pallas BatchConv2D_5D does not match reference")
    print("KERNEL_OK")
</pallas_src>

<mosaic_0001>
module attributes {stable_mosaic.version = 11 : i64} {
  func.func @_bconv_kernel(%arg0: i32, %arg1: i32, %arg2: memref<1x5x40xf32, #tpu.memory_space<vmem>>, %arg3: memref<1x5x1xf32, #tpu.memory_space<vmem>>, %arg4: memref<1x40x768xf32, #tpu.memory_space<vmem>>, %arg5: memref<1x5x768xf32, #tpu.memory_space<vmem>>) attributes {dimension_semantics = [#tpu.dimension_semantics<parallel>, #tpu.dimension_semantics<parallel>], iteration_bounds = array<i64: 2, 1>, scalar_prefetch = 0 : i64, scratch_operands = 0 : i64, tpu.core_type = #tpu.core_type<tc>, window_params = [{transform_indices = @transform_0, window_bounds = array<i64: 1, 5, 40>}, {transform_indices = @transform_1, window_bounds = array<i64: 1, 5, 1>}, {transform_indices = @transform_2, window_bounds = array<i64: 1, 40, 768>}, {transform_indices = @transform_3, window_bounds = array<i64: 1, 5, 768>}]} {
    %c0 = arith.constant 0 : index
    %c0_0 = arith.constant 0 : index
    %c0_1 = arith.constant 0 : index
    %0 = vector.load %arg2[%c0, %c0_0, %c0_1] : memref<1x5x40xf32, #tpu.memory_space<vmem>>, vector<1x5x40xf32>
    %1 = vector.shape_cast %0 : vector<1x5x40xf32> to vector<5x40xf32>
    %c0_2 = arith.constant 0 : index
    %c0_3 = arith.constant 0 : index
    %c0_4 = arith.constant 0 : index
    %2 = vector.load %arg4[%c0_2, %c0_3, %c0_4] : memref<1x40x768xf32, #tpu.memory_space<vmem>>, vector<1x40x768xf32>
    %3 = vector.shape_cast %2 : vector<1x40x768xf32> to vector<40x768xf32>
    %cst = arith.constant dense<0.000000e+00> : vector<5x768xf32>
    %4 = tpu.matmul %1, %3, %cst {dimension_numbers = #tpu.dot_dimension_numbers<[1], [0], [0], [1], [0, 0, 1, 1], [], []>} : vector<5x40xf32>, vector<40x768xf32>, vector<5x768xf32> -> vector<5x768xf32>
    %c0_5 = arith.constant 0 : index
    %c0_6 = arith.constant 0 : index
    %c0_7 = arith.constant 0 : index
    %5 = vector.load %arg3[%c0_5, %c0_6, %c0_7] : memref<1x5x1xf32, #tpu.memory_space<vmem>>, vector<1x5x1xf32>
    %6 = vector.shape_cast %5 : vector<1x5x1xf32> to vector<5x1xf32>
    %7 = vector.broadcast %6 : vector<5x1xf32> to vector<5x768xf32>
    %8 = arith.addf %4, %7 : vector<5x768xf32>
    %c0_8 = arith.constant 0 : index
    %c0_9 = arith.constant 0 : index
    %c0_10 = arith.constant 0 : index
    %9 = vector.load %arg5[%c0_8, %c0_9, %c0_10] : memref<1x5x768xf32, #tpu.memory_space<vmem>>, vector<1x5x768xf32>
    %10 = vector.shape_cast %9 : vector<1x5x768xf32> to vector<5x768xf32>
    %11 = vector.shape_cast %8 : vector<5x768xf32> to vector<1x5x768xf32>
    tpu.vector_store %arg5[%c0_8, %c0_9, %c0_10], %11 {strides = array<i32>} : memref<1x5x768xf32, #tpu.memory_space<vmem>>, vector<1x5x768xf32>,
    return
  }
  func.func @transform_0(%arg0: i32, %arg1: i32) -> (i32, i32, i32) {
    %c0_i32 = arith.constant 0 : i32
    %c0_i32_0 = arith.constant 0 : i32
    %c0_i32_1 = arith.constant 0 : i32
    return %arg0, %c0_i32, %c0_i32_0 : i32, i32, i32
  }
  func.func @transform_1(%arg0: i32, %arg1: i32) -> (i32, i32, i32) {
    %c0_i32 = arith.constant 0 : i32
    %c0_i32_0 = arith.constant 0 : i32
    %c0_i32_1 = arith.constant 0 : i32
    return %arg0, %c0_i32, %c0_i32_0 : i32, i32, i32
  }
  func.func @transform_2(%arg0: i32, %arg1: i32) -> (i32, i32, i32) {
    %c0_i32 = arith.constant 0 : i32
    %c0_i32_0 = arith.constant 0 : i32
    return %arg0, %c0_i32, %arg1 : i32, i32, i32
  }
  func.func @transform_3(%arg0: i32, %arg1: i32) -> (i32, i32, i32) {
    %c0_i32 = arith.constant 0 : i32
    %c0_i32_0 = arith.constant 0 : i32
    return %arg0, %c0_i32, %arg1 : i32, i32, i32
  }
}

</mosaic_0001>

<llo_original>
// kernel: tpu_custom_call.1
$region0: #{tpu_custom_call.1}
  #allocation0 [shape = 'u32[]', space=smem, size = 0x4, offset = 0x4, fixed_abs, tag = 'smem constant byte address 0x4 - core index']
  #allocation1 [shape = 'u32[72,128]{1,0:T(1,128)}', space=vmem, size = 0x9000, scoped, tag = 'internal scratch']
  %s0 = inlined_call_operand.vmem [shape: f32[2,5,40], index: 0, kind: input, shape index: {}]
  %s1 = inlined_call_operand.vmem [shape: f32[2,5,1], index: 1, kind: input, shape index: {}]
  %s2 = inlined_call_operand.hbm [shape: f32[2,40,768], index: 2, kind: input, shape index: {}]
  %s3 = inlined_call_operand.vmem [shape: f32[2,5,768], index: 3, kind: output, shape index: {}]
  %s4 = sld [smem:[#allocation0]]
  $region49: #{tpu_custom_call.1} parent=0
    _
  %s6 = ssub.s32 1, %s4
  %s7 = scalar_select 0, %s6, %s4
  $region1: #{tpu_custom_call.1} parent=0
    #allocation2 [shape = 'u8[245760]{0}', space=vmem, size = 0x3c000, scoped, tag = 'input window, operand 2']
    #allocation3 [shape = 's32[2]{0}', space=sflag, size = 0x8, scoped, tag = 'scoped memory for tpu_custom_call.1']
    %8 = vsyncpa [#allocation3], 0
    %s9 = scalar_lea.sflag [#allocation3], 1
    %10 = vsyncpa %s9, 0
    loop: start=0, step=1, limit=4
    $region2: #{tpu_custom_call.1} parent=1 // loop_pre_header
      _
    $region3: #{tpu_custom_call.1} parent=1 // loop_header
      %s12 = sphi 0, %s16
      %p13 = scmp.ge.s32.totalorder %s12, 4
      %s19 = sphi 0, %s31
      %s20 = sphi 0, %s27
      %s21 = sphi 0, %s19
      %s22 = sphi 0, %s20
      %s23 = sphi 0, %s21
      %s24 = sphi 0, %s22
      %s34 = sphi 0, %s36
      %s37 = sphi 0, %s34
      %s38 = sphi 0, %s37
      %s54 = sphi 0, %s38
      %s60 = sphi 0, %s62
      %s63 = sphi 0, %s60
      %s64 = sphi 0, %s63
      %s80 = sphi 0, %s64
      %s88 = sphi 0, %s90
      %s91 = sphi 0, %s88
      %s92 = sphi 0, %s91
      %s108 = sphi 0, %s92
      %s116 = sphi 0, %s118
      %s119 = sphi 0, %s116
      %s120 = sphi 0, %s119
      %s136 = sphi 0, %s120
    $region4: #{tpu_custom_call.1} parent=1 // loop_header_branch
      %15 = sbr.rel (%p13) target = $region8
    $region5: #{tpu_custom_call.1} parent=1 // loop_body
      %s17 = ssub.s32 %s12, 1
      %s18 = ssub.s32 %s12, 2
      %s25 = sadd.s32 1, %s20
      %p26 = scmp.ge.s32.totalorder %s25, 1
      %s27 = scalar_select %p26, 0, %s25
      %s28 = sadd.s32 1, %s19
      %s29 = scalar_select %p26, %s28, %s19
      %p30 = scmp.ge.s32.totalorder %s29, 2
      %s31 = scalar_select %p30, 0, %s29
      %s32 = ssub.s32 %s19, %s31
      %p33 = scmp.eq.s32.totalorder %s32, 0
      %s35 = sadd.s32 %s34, 1
      %s36 = scalar_select %p33, %s34, %s35
      %p39 = pneg %p33
      %p40 = scmp.eq.s32.totalorder %s12, 1
      %p41 = por %p39, %p40
      %p42 = scmp.ne.s32.totalorder %s34, %s37
      %p43 = scmp.eq.s32.totalorder %s12, 0
      %p44 = por %p42, %p43
      %p45 = scmp.ne.s32.totalorder %s34, %s37
      %p46 = scmp.eq.s32.totalorder %s17, 1
      %p47 = por %p45, %p46
      %p48 = scmp.ne.s32.totalorder %s37, %s38
      %p49 = scmp.eq.s32.totalorder %s17, 0
      %p50 = por %p48, %p49
      %p51 = scmp.ne.s32.totalorder %s37, %s38
      %p52 = scmp.eq.s32.totalorder %s18, 1
      %p53 = por %p51, %p52
      %p55 = scmp.ne.s32.totalorder %s38, %s54
      %p56 = scmp.eq.s32.totalorder %s18, 0
      %p57 = por %p55, %p56
      %s58 = ssub.s32 %s19, %s31
      %p59 = scmp.eq.s32.totalorder %s58, 0
      %s61 = sadd.s32 %s60, 1
      %s62 = scalar_select %p59, %s60, %s61
      %p65 = pneg %p59
      %p66 = scmp.eq.s32.totalorder %s12, 1
      %p67 = por %p65, %p66
      %p68 = scmp.ne.s32.totalorder %s60, %s63
      %p69 = scmp.eq.s32.totalorder %s12, 0
      %p70 = por %p68, %p69
      %p71 = scmp.ne.s32.totalorder %s60, %s63
      %p72 = scmp.eq.s32.totalorder %s17, 1
      %p73 = por %p71, %p72
      %p74 = scmp.ne.s32.totalorder %s63, %s64
      %p75 = scmp.eq.s32.totalorder %s17, 0
      %p76 = por %p74, %p75
      %p77 = scmp.ne.s32.totalorder %s63, %s64
      %p78 = scmp.eq.s32.totalorder %s18, 1
      %p79 = por %p77, %p78
      %p81 = scmp.ne.s32.totalorder %s64, %s80
      %p82 = scmp.eq.s32.totalorder %s18, 0
      %p83 = por %p81, %p82
      %s84 = ssub.s32 %s19, %s31
      %s85 = ssub.s32 %s20, %s27
      %s86 = sor.u32 %s84, %s85
      %p87 = scmp.eq.s32.totalorder %s86, 0
      %s89 = sadd.s32 %s88, 1
      %s90 = scalar_select %p87, %s88, %s89
      %p93 = pneg %p87
      %p94 = scmp.eq.s32.totalorder %s12, 1
      %p95 = por %p93, %p94
      %p96 = scmp.ne.s32.totalorder %s88, %s91
      %p97 = scmp.eq.s32.totalorder %s12, 0
      %p98 = por %p96, %p97
      %p99 = scmp.ne.s32.totalorder %s88, %s91
      %p100 = scmp.eq.s32.totalorder %s17, 1
      %p101 = por %p99, %p100
      %p102 = scmp.ne.s32.totalorder %s91, %s92
      %p103 = scmp.eq.s32.totalorder %s17, 0
      %p104 = por %p102, %p103
      %p105 = scmp.ne.s32.totalorder %s91, %s92
      %p106 = scmp.eq.s32.totalorder %s18, 1
      %p107 = por %p105, %p106
      %p109 = scmp.ne.s32.totalorder %s92, %s108
      %p110 = scmp.eq.s32.totalorder %s18, 0
      %p111 = por %p109, %p110
      %s112 = ssub.s32 %s19, %s31
      %s113 = ssub.s32 %s20, %s27
      %s114 = sor.u32 %s112, %s113
      %p115 = scmp.eq.s32.totalorder %s114, 0
      %s117 = sadd.s32 %s116, 1
      %s118 = scalar_select %p115, %s116, %s117
      %p121 = pneg %p115
      %p122 = scmp.eq.s32.totalorder %s12, 1
      %p123 = por %p121, %p122
      %p124 = scmp.ne.s32.totalorder %s116, %s119
      %p125 = scmp.eq.s32.totalorder %s12, 0
      %p126 = por %p124, %p125
      %p127 = scmp.ne.s32.totalorder %s116, %s119
      %p128 = scmp.eq.s32.totalorder %s17, 1
      %p129 = por %p127, %p128
      %p130 = scmp.ne.s32.totalorder %s119, %s120
      %p131 = scmp.eq.s32.totalorder %s17, 0
      %p132 = por %p130, %p131
      %p133 = scmp.ne.s32.totalorder %s119, %s120
      %p134 = scmp.eq.s32.totalorder %s18, 1
      %p135 = por %p133, %p134
      %p137 = scmp.ne.s32.totalorder %s120, %s136
      %p138 = scmp.eq.s32.totalorder %s18, 0
      %p139 = por %p137, %p138
      %p140 = scmp.le.s32.totalorder 1, %s12
      %p141 = scmp.lt.s32.totalorder %s12, 3
      %p142 = pnand %p140, %p141
      %p143 = pneg %p142
      // Predicated region
      $region9: #{tpu_custom_call.1} parent=5 // pred_check
        _
      $region10: #{tpu_custom_call.1} parent=5 // pred_check_branch
        %145 = sbr.rel (%p142) target = $region12
      $region11: #{tpu_custom_call.1} parent=5 // pred_region
        %s146 = ssub.s32 %s12, 1
      $region12: #{tpu_custom_call.1} parent=5 // pred_fallthru
        _
      %p147 = scmp.lt.s32.totalorder %s12, 2
      // Predicated region
      $region13: #{tpu_custom_call.1} parent=5 // pred_check
        %p148 = pneg %p147
      $region14: #{tpu_custom_call.1} parent=5 // pred_check_branch
        %150 = sbr.rel (%p148) target = $region16
      $region15: #{tpu_custom_call.1} parent=5 // pred_region
        // Predicated region
        $region17: #{tpu_custom_call.1} parent=15 // pred_check
          %p151 = pneg %p44
        $region18: #{tpu_custom_call.1} parent=15 // pred_check_branch
          %153 = sbr.rel (%p151) target = $region20
        $region19: #{tpu_custom_call.1} parent=15 // pred_region
          %p154 = scmp.lt.s32.totalorder %s19, 1
          %s155 = scalar_select %p154, %s19, 1
          %s156 = smul.addr %s155, 8
          %s157 = scalar_lea.vmem %s0, %s156
        $region20: #{tpu_custom_call.1} parent=15 // pred_fallthru
          _
        // Predicated region
        $region21: #{tpu_custom_call.1} parent=15 // pred_check
          %p158 = pneg %p70
        $region22: #{tpu_custom_call.1} parent=15 // pred_check_branch
          %160 = sbr.rel (%p158) target = $region24
        $region23: #{tpu_custom_call.1} parent=15 // pred_region
          %p161 = scmp.lt.s32.totalorder %s19, 1
          %s162 = scalar_select %p161, %s19, 1
          %s163 = smul.addr %s162, 8
          %s164 = scalar_lea.vmem %s1, %s163
        $region24: #{tpu_custom_call.1} parent=15 // pred_fallthru
          _
        // Predicated region
        $region25: #{tpu_custom_call.1} parent=15 // pred_check
          %p165 = pneg %p98
        $region26: #{tpu_custom_call.1} parent=15 // pred_check_branch
          %167 = sbr.rel (%p165) target = $region28
        $region27: #{tpu_custom_call.1} parent=15 // pred_region
          %s168 = sand.u32 %s88, 1
          %s169 = scalar_lea.sflag [#allocation3], %s168
          %s170 = sand.u32 %s88, 1
          %s171 = smul.addr %s170, 240
          %s172 = scalar_lea.vmem [#allocation2], %s171
          %s173 = smul.u32 6, %s20
          %175 = vsyncadd %s169, 0
          %s176 = smul.addr %s19, 30
          %s177 = sadd.s32 %s173, %s176
          %s178 = smul.addr %s177, 8
          %s179 = scalar_lea.hbm %s2, %s178
          %s180 = sshll.u32 %s179, 4
          %s181 = int_to_ptr.hbm [resolvable:$true] %s180
          %s182 = sshll.u32 %s172, 4
          %s183 = int_to_ptr.vmem [resolvable:$true] %s182
          %188 = dma.hbm_to_vmem [thread:$0]  %s181, 3840, %s183, %s169, 768, 768, 48
        $region28: #{tpu_custom_call.1} parent=15 // pred_fallthru
          _
      $region16: #{tpu_custom_call.1} parent=5 // pred_fallthru
        _
      %p189 = scmp.le.s32.totalorder 1, %s12
      %p190 = scmp.lt.s32.totalorder %s12, 3
      %p191 = pnand %p189, %p190
      %p192 = pneg %p191
      // Predicated region
      $region29: #{tpu_custom_call.1} parent=5 // pred_check
        _
      $region30: #{tpu_custom_call.1} parent=5 // pred_check_branch
        %194 = sbr.rel (%p191) target = $region32
      $region31: #{tpu_custom_call.1} parent=5 // pred_region
        %s195 = ssub.s32 %s12, 1
        %s196 = sand.u32 %s91, 1
        %s197 = scalar_lea.sflag [#allocation3], %s196
        %s198 = sand.u32 %s91, 1
        %s199 = smul.addr %s198, 240
        %s200 = scalar_lea.vmem [#allocation2], %s199
        // Predicated region
        $region33: #{tpu_custom_call.1} parent=31 // pred_check
          %p201 = pneg %p104
        $region34: #{tpu_custom_call.1} parent=31 // pred_check_branch
          %203 = sbr.rel (%p201) target = $region36
        $region35: #{tpu_custom_call.1} parent=31 // pred_region
          %205 = dma.done %s197, 3840
        $region36: #{tpu_custom_call.1} parent=31 // pred_fallthru
          _
        %p206 = scmp.lt.s32.totalorder %s21, 1
        %s207 = scalar_select %p206, %s21, 1
        %s208 = smul.addr %s207, 8
        %s209 = scalar_lea.vmem %s0, %s208
        %p210 = pneg %p50
        %p211 = pneg %p47
        %p212 = scmp.lt.s32.totalorder %s21, 1
        %s213 = scalar_select %p212, %s21, 1
        %s214 = smul.addr %s213, 8
        %s215 = scalar_lea.vmem %s1, %s214
        %p216 = pneg %p76
        %p217 = pneg %p73
        %s218 = sand.u32 %s91, 1
        %s219 = scalar_lea.sflag [#allocation3], %s218
        %s220 = sand.u32 %s91, 1
        %s221 = smul.addr %s220, 240
        %s222 = scalar_lea.vmem [#allocation2], %s221
        %p223 = pneg %p104
        %p224 = pneg %p101
        %p225 = pneg %p132
        %p226 = pneg %p129
        %s227 = smul.u32 6, %s22
        %p228 = scmp.lt.s32.totalorder %s21, 1
        %s229 = scalar_select %p228, %s21, 1
        %p230 = scmp.lt.s32.totalorder %s227, 5
        %s231 = scalar_select %p230, %s227, 5
        %s232 = smul.addr %s229, 6
        %s233 = sadd.s32 %s231, %s232
        %s234 = smul.addr %s233, 8
        %s235 = scalar_lea.vmem %s3, %s234
        %p236 = scmp.lt.s32.totalorder %s21, 1
        %s237 = scalar_select %p236, %s21, 1
        %s238 = smul.addr %s237, 8
        %s239 = scalar_lea.vmem %s0, %s238
        %p240 = scmp.lt.s32.totalorder %s21, 1
        %s241 = scalar_select %p240, %s21, 1
        %s242 = smul.addr %s241, 8
        %s243 = scalar_lea.vmem %s1, %s242
        %s244 = smul.u32 6, %s22
        %s245 = smul.u32 6, %s22
        %p246 = scmp.lt.s32.totalorder %s21, 1
        %s247 = scalar_select %p246, %s21, 1
        %p248 = scmp.lt.s32.totalorder %s245, 5
        %s249 = scalar_select %p248, %s245, 5
        %s250 = smul.addr %s247, 6
        %s251 = sadd.s32 %s249, %s250
        %s252 = smul.addr %s251, 8
        %s253 = scalar_lea.vmem %s3, %s252
        %s254 = smul.u32 6, %s22
        %v255 = vld [vmem:[%s239] sm:$0x1f]
        %v256 = vld [vmem:[%s200] sm:$0xff]
        %v257 = vld [vmem:[%s200 + $0x8] sm:$0xff]
        %v258 = vld [vmem:[%s200 + $0x10] sm:$0xff]
        %v259 = vld [vmem:[%s200 + $0x18] sm:$0xff]
        %v260 = vld [vmem:[%s200 + $0x20] sm:$0xff]
        %v261 = vld [vmem:[%s200 + $0x28] sm:$0xff]
        %v262 = vld [vmem:[%s200 + $0x30] sm:$0xff]
        %v263 = vld [vmem:[%s200 + $0x38] sm:$0xff]
        %v264 = vld [vmem:[%s200 + $0x40] sm:$0xff]
        %v265 = vld [vmem:[%s200 + $0x48] sm:$0xff]
        %v266 = vld [vmem:[%s200 + $0x50] sm:$0xff]
        %v267 = vld [vmem:[%s200 + $0x58] sm:$0xff]
        %v268 = vld [vmem:[%s200 + $0x60] sm:$0xff]
        %v269 = vld [vmem:[%s200 + $0x68] sm:$0xff]
        %v270 = vld [vmem:[%s200 + $0x70] sm:$0xff]
        %v271 = vld [vmem:[%s200 + $0x78] sm:$0xff]
        %v272 = vld [vmem:[%s200 + $0x80] sm:$0xff]
        %v273 = vld [vmem:[%s200 + $0x88] sm:$0xff]
        %v274 = vld [vmem:[%s200 + $0x90] sm:$0xff]
        %v275 = vld [vmem:[%s200 + $0x98] sm:$0xff]
        %v276 = vld [vmem:[%s200 + $0xa0] sm:$0xff]
        %v277 = vld [vmem:[%s200 + $0xa8] sm:$0xff]
        %v278 = vld [vmem:[%s200 + $0xb0] sm:$0xff]
        %v279 = vld [vmem:[%s200 + $0xb8] sm:$0xff]
        %v280 = vld [vmem:[%s200 + $0xc0] sm:$0xff]
        %v281 = vld [vmem:[%s200 + $0xc8] sm:$0xff]
        %v282 = vld [vmem:[%s200 + $0xd0] sm:$0xff]
        %v283 = vld [vmem:[%s200 + $0xd8] sm:$0xff]
        %v284 = vld [vmem:[%s200 + $0xe0] sm:$0xff]
        %v285 = vld [vmem:[%s200 + $0xe8] sm:$0xff]
        %v286 = vld [vmem:[%s243] sm:$0x1f]
        %288 = vset.pattern.permute.xlu0 0
        %289 = vperm.xlu0 %288, %v286
        %v290 = vpop.permute.xlu0 %289
        %vm292 = vcmask 326656
        %v294 = vsel %vm292, %v255, 0
        %296 = vmatpush.msra.mxu0 0.0
        %297 = vmatpush.msra.mxu0 0.0
        %298 = vmatpush.msra.mxu0 0.0
        %299 = vmatpush.msra.mxu0 0.0
        %300 = vmatpush.msra.mxu0 0.0
        %301 = vmatpush.msra.mxu0 0.0
        %302 = vmatpush.msra.mxu0 0.0
        %303 = vmatpush.msra.mxu0 0.0
        %304 = vmatpush.msra.mxu0 0.0
        %305 = vmatpush.msra.mxu0 0.0
        %306 = vmatpush.msra.mxu0 0.0
        %307 = vmatpush.msra.mxu0 %v280
        %308 = vmatpush.msra.mxu0 %v274
        %309 = vmatpush.msra.mxu0 %v268
        %310 = vmatpush.msra.mxu0 %v262
        %311 = vmatpush.msra.mxu0 %v256
        %312 = vmatmul.f32.gmra.mxu0 %v294
        %v313 = vpop.f32.mrf.mxu0
        %v314 = vadd.f32 %v290, %v313
        %315 = vdwg.mxu0
        %316 = vmatpush.msra.mxu0 0.0
        %317 = vmatpush.msra.mxu0 0.0
        %318 = vmatpush.msra.mxu0 0.0
        %319 = vmatpush.msra.mxu0 0.0
        %320 = vmatpush.msra.mxu0 0.0
        %321 = vmatpush.msra.mxu0 0.0
        %322 = vmatpush.msra.mxu0 0.0
        %323 = vmatpush.msra.mxu0 0.0
        %324 = vmatpush.msra.mxu0 0.0
        %325 = vmatpush.msra.mxu0 0.0
        %326 = vmatpush.msra.mxu0 0.0
        %327 = vmatpush.msra.mxu0 %v281
        %328 = vmatpush.msra.mxu0 %v275
        %329 = vmatpush.msra.mxu0 %v269
        %330 = vmatpush.msra.mxu0 %v263
        %331 = vmatpush.msra.mxu0 %v257
        %332 = vmatmul.f32.gmra.mxu0 %v294
        %v333 = vpop.f32.mrf.mxu0
        %v334 = vadd.f32 %v290, %v333
        %335 = vdwg.mxu0
        %336 = vmatpush.msra.mxu0 0.0
        %337 = vmatpush.msra.mxu0 0.0
        %338 = vmatpush.msra.mxu0 0.0
        %339 = vmatpush.msra.mxu0 0.0
        %340 = vmatpush.msra.mxu0 0.0
        %341 = vmatpush.msra.mxu0 0.0
        %342 = vmatpush.msra.mxu0 0.0
        %343 = vmatpush.msra.mxu0 0.0
        %344 = vmatpush.msra.mxu0 0.0
        %345 = vmatpush.msra.mxu0 0.0
        %346 = vmatpush.msra.mxu0 0.0
        %347 = vmatpush.msra.mxu0 %v282
        %348 = vmatpush.msra.mxu0 %v276
        %349 = vmatpush.msra.mxu0 %v270
        %350 = vmatpush.msra.mxu0 %v264
        %351 = vmatpush.msra.mxu0 %v258
        %352 = vmatmul.f32.gmra.mxu0 %v294
        %v353 = vpop.f32.mrf.mxu0
        %v354 = vadd.f32 %v290, %v353
        %355 = vdwg.mxu0
        %356 = vmatpush.msra.mxu0 0.0
        %357 = vmatpush.msra.mxu0 0.0
        %358 = vmatpush.msra.mxu0 0.0
        %359 = vmatpush.msra.mxu0 0.0
        %360 = vmatpush.msra.mxu0 0.0
        %361 = vmatpush.msra.mxu0 0.0
        %362 = vmatpush.msra.mxu0 0.0
        %363 = vmatpush.msra.mxu0 0.0
        %364 = vmatpush.msra.mxu0 0.0
        %365 = vmatpush.msra.mxu0 0.0
        %366 = vmatpush.msra.mxu0 0.0
        %367 = vmatpush.msra.mxu0 %v283
        %368 = vmatpush.msra.mxu0 %v277
        %369 = vmatpush.msra.mxu0 %v271
        %370 = vmatpush.msra.mxu0 %v265
        %371 = vmatpush.msra.mxu0 %v259
        %372 = vmatmul.f32.gmra.mxu0 %v294
        %v373 = vpop.f32.mrf.mxu0
        %v374 = vadd.f32 %v290, %v373
        %375 = vdwg.mxu0
        %376 = vmatpush.msra.mxu0 0.0
        %377 = vmatpush.msra.mxu0 0.0
        %378 = vmatpush.msra.mxu0 0.0
        %379 = vmatpush.msra.mxu0 0.0
        %380 = vmatpush.msra.mxu0 0.0
        %381 = vmatpush.msra.mxu0 0.0
        %382 = vmatpush.msra.mxu0 0.0
        %383 = vmatpush.msra.mxu0 0.0
        %384 = vmatpush.msra.mxu0 0.0
        %385 = vmatpush.msra.mxu0 0.0
        %386 = vmatpush.msra.mxu0 0.0
        %387 = vmatpush.msra.mxu0 %v284
        %388 = vmatpush.msra.mxu0 %v278
        %389 = vmatpush.msra.mxu0 %v272
        %390 = vmatpush.msra.mxu0 %v266
        %391 = vmatpush.msra.mxu0 %v260
        %392 = vmatmul.f32.gmra.mxu0 %v294
        %v393 = vpop.f32.mrf.mxu0
        %v394 = vadd.f32 %v290, %v393
        %395 = vdwg.mxu0
        %396 = vmatpush.msra.mxu0 0.0
        %397 = vmatpush.msra.mxu0 0.0
        %398 = vmatpush.msra.mxu0 0.0
        %399 = vmatpush.msra.mxu0 0.0
        %400 = vmatpush.msra.mxu0 0.0
        %401 = vmatpush.msra.mxu0 0.0
        %402 = vmatpush.msra.mxu0 0.0
        %403 = vmatpush.msra.mxu0 0.0
        %404 = vmatpush.msra.mxu0 0.0
        %405 = vmatpush.msra.mxu0 0.0
        %406 = vmatpush.msra.mxu0 0.0
        %407 = vmatpush.msra.mxu0 %v285
        %408 = vmatpush.msra.mxu0 %v279
        %409 = vmatpush.msra.mxu0 %v273
        %410 = vmatpush.msra.mxu0 %v267
        %411 = vmatpush.msra.mxu0 %v261
        %412 = vmatmul.f32.gmra.mxu0 %v294
        %v413 = vpop.f32.mrf.mxu0
        %v414 = vadd.f32 %v290, %v413
        %415 = vdwg.mxu0
        %416 = vst [vmem:[%s253] sm:$0x1f] %v314
        %417 = vst [vmem:[%s253 + $0x8] sm:$0x1f] %v334
        %418 = vst [vmem:[%s253 + $0x10] sm:$0x1f] %v354
        %419 = vst [vmem:[%s253 + $0x18] sm:$0x1f] %v374
        %420 = vst [vmem:[%s253 + $0x20] sm:$0x1f] %v394
        %421 = vst [vmem:[%s253 + $0x28] sm:$0x1f] %v414
        %s422 = smul.u32 6, %s22
        %p423 = scmp.lt.s32.totalorder %s21, 1
        %s424 = scalar_select %p423, %s21, 1
        %p425 = scmp.lt.s32.totalorder %s422, 5
        %s426 = scalar_select %p425, %s422, 5
        %s427 = smul.addr %s424, 6
        %s428 = sadd.s32 %s426, %s427
        %s429 = smul.addr %s428, 8
        %s430 = scalar_lea.vmem %s3, %s429
        // Predicated region
        $region37: #{tpu_custom_call.1} parent=31 // pred_check
          %p431 = pneg %p129
        $region38: #{tpu_custom_call.1} parent=31 // pred_check_branch
          %433 = sbr.rel (%p431) target = $region40
        $region39: #{tpu_custom_call.1} parent=31 // pred_region
          %s434 = smul.u32 6, %s22
        $region40: #{tpu_custom_call.1} parent=31 // pred_fallthru
          _
      $region32: #{tpu_custom_call.1} parent=5 // pred_fallthru
        _
      %p435 = scmp.le.s32.totalorder 2, %s12
      // Predicated region
      $region41: #{tpu_custom_call.1} parent=5 // pred_check
        %p436 = pneg %p435
      $region42: #{tpu_custom_call.1} parent=5 // pred_check_branch
        %438 = sbr.rel (%p436) target = $region44
      $region43: #{tpu_custom_call.1} parent=5 // pred_region
        %s439 = ssub.s32 %s12, 2
        // Predicated region
        $region45: #{tpu_custom_call.1} parent=43 // pred_check
          %p440 = pneg %p135
        $region46: #{tpu_custom_call.1} parent=43 // pred_check_branch
          %442 = sbr.rel (%p440) target = $region48
        $region47: #{tpu_custom_call.1} parent=43 // pred_region
          %s443 = smul.u32 6, %s24
          %p444 = scmp.lt.s32.totalorder %s23, 1
          %s445 = scalar_select %p444, %s23, 1
          %p446 = scmp.lt.s32.totalorder %s443, 5
          %s447 = scalar_select %p446, %s443, 5
          %s448 = smul.addr %s445, 6
          %s449 = sadd.s32 %s447, %s448
          %s450 = smul.addr %s449, 8
          %s451 = scalar_lea.vmem %s3, %s450
        $region48: #{tpu_custom_call.1} parent=43 // pred_fallthru
          _
      $region44: #{tpu_custom_call.1} parent=5 // pred_fallthru
        _
    $region6: #{tpu_custom_call.1} parent=1 // loop_footer
      %s16 = sadd.s32 1, %s12
    $region7: #{tpu_custom_call.1} parent=1 // loop_footer_branch
      %11 = sbr.rel target = $region3
    $region8: #{tpu_custom_call.1} parent=1 // loop_exit
      _
    %452 = vsyncpa [#allocation3], 1
    %s453 = scalar_lea.sflag [#allocation3], 1
    %454 = vsyncpa %s453, 1

</llo_original>
